<compile_context>
chip_gen: v5e
topology: v5e:2x2
jax: 0.10.0
libtpu: 0.0.40
codegen_flags: <defaults>
</compile_context>

<pallas_src>
import functools
import math

import numpy as np
import jax
import jax.numpy as jnp
from jax import lax
from jax.experimental import pallas as pl
from jax.experimental.pallas import tpu as pltpu


# ---------------------------------------------------------------------------
# Kernels
# ---------------------------------------------------------------------------

def _pe_add_kernel(x_ref, pe_ref, o_ref):
    # x_ref / o_ref: (B, tF); pe_ref: (1, tF) -> broadcast over the batch rows.
    o_ref[...] = (x_ref[...] + pe_ref[...]).astype(o_ref.dtype)


def _pe_add_dropout_kernel(seed_ref, x_ref, pe_ref, o_ref, *, rate, f_total, t_f):
    # Fused (x + pe) followed by inverted dropout.
    # Portable counter-based RNG: murmur3 fmix32 over the global element index
    # mixed with the user seed (no TPU-only PRNG primitives -> lowers everywhere).
    f = pl.program_id(0)
    y = x_ref[...] + pe_ref[...]                      # (bB, tF), native dtype add
    b_blk = y.shape[0]

    row = lax.broadcasted_iota(jnp.int32, (b_blk, t_f), 0).astype(jnp.uint32)
    col = lax.broadcasted_iota(jnp.int32, (b_blk, t_f), 1).astype(jnp.uint32)
    base = (f * t_f).astype(jnp.uint32)
    idx = row * jnp.uint32(f_total) + base + col      # global flat element index

    h = idx ^ seed_ref[0].astype(jnp.uint32)
    h = h * jnp.uint32(0xCC9E2D51)
    h = h ^ (h >> jnp.uint32(16))
    h = h * jnp.uint32(0x85EBCA6B)
    h = h ^ (h >> jnp.uint32(13))
    h = h * jnp.uint32(0xC2B2AE35)
    h = h ^ (h >> jnp.uint32(16))

    # Integer threshold compare on the top 24 bits (no uint->float conversion).
    thresh = jnp.int32(int(rate * float(1 << 24)))
    keep = (h >> jnp.uint32(8)).astype(jnp.int32) >= thresh

    scale = jnp.asarray(1.0 / (1.0 - rate), dtype=y.dtype)
    o_ref[...] = jnp.where(keep, y * scale, jnp.zeros_like(y)).astype(o_ref.dtype)


# ---------------------------------------------------------------------------
# PE buffer construction (mirrors the PyTorch register_buffer computation)
# ---------------------------------------------------------------------------

def build_positional_encoding(seq_len, d_model, dtype=jnp.float32):
    position = np.arange(seq_len, dtype=np.float32)[:, None]
    div_term = np.exp(np.arange(0, d_model, 2, dtype=np.float32)
                      * (-math.log(10000.0) / d_model))
    pe = np.zeros((seq_len, d_model), dtype=np.float32)
    pe[:, 0::2] = np.sin(position * div_term)
    pe[:, 1::2] = np.cos(position * div_term)
    return jnp.asarray(pe, dtype=dtype)


# ---------------------------------------------------------------------------
# Forward wrapper
# ---------------------------------------------------------------------------

def _pick_f_tile(F, B, itemsize, vmem_budget_bytes=40 * 1024 * 1024):
    """Largest tF (multiple of 128 dividing F) whose double-buffered working set
    (x block + out block + pe block, padded to 8 sublanes) fits the VMEM budget."""
    if F % 128 != 0:
        return None
    padded_b = ((B + 7) // 8) * 8
    bytes_per_tf = 2 * (2 * padded_b + 8) * itemsize   # x + out + pe, 2x buffered
    max_tf = max(128, (vmem_budget_bytes // bytes_per_tf) // 128 * 128)
    n = F // 128
    d_max = max(1, min(n, max_tf // 128))
    for d in range(d_max, 0, -1):
        if n % d == 0:
            return 128 * d
    return 128


def positional_encoding_forward(x, pe, *, dropout_rate=0.1,
                                deterministic=True, seed=0):
    """x: (B, T, D); pe: (seq_len, D), seq_len >= T. Returns dropout(x + pe[:T])."""
    B, T, D = x.shape
    S, Dp = pe.shape
    assert Dp == D and S >= T

    F = T * D
    itemsize = jnp.dtype(x.dtype).itemsize

    pe = pe.astype(x.dtype)            # cast once: no per-block converts / extra DMA
    x2 = x.reshape(B, F)               # contiguous flatten -> lane-dense last axis

    tF = _pick_f_tile(F, B, itemsize)
    if tF is None:
        # TODO(synk): F = T*D not a multiple of 128 -> single full-size block
        # fallback (fine for small shapes; pad T for very long odd sequences).
        tF = F
        pe2 = pe[:T].reshape(1, F)
    else:
        # Full PE buffer flattened; the BlockSpec only addresses the first T*D
        # elements, so no pe[:T] copy is materialized in HBM.
        pe2 = pe.reshape(1, S * D)
    n_blocks = F // tF

    x_spec = pl.BlockSpec((B, tF), lambda f, *_: (0, f))
    pe_spec = pl.BlockSpec((1, tF), lambda f, *_: (0, f))
    out_spec = pl.BlockSpec((B, tF), lambda f, *_: (0, f))

    cost = pl.CostEstimate(
        flops=B * F,
        transcendentals=0,
        bytes_accessed=(2 * B * F + F) * itemsize,
    )
    cparams = pltpu.CompilerParams(
        dimension_semantics=("parallel",),
        vmem_limit_bytes=48 * 1024 * 1024,
    )
    out_shape = jax.ShapeDtypeStruct((B, F), x.dtype)

    if deterministic or dropout_rate <= 0.0:
        grid_spec = pltpu.PrefetchScalarGridSpec(
            num_scalar_prefetch=0, grid=(n_blocks,),
            in_specs=[x_spec, pe_spec], out_specs=out_spec)
        out2 = pl.pallas_call(
            _pe_add_kernel, out_shape=out_shape, grid_spec=grid_spec,
            compiler_params=cparams, cost_estimate=cost,
        )(x2, pe2)
    else:
        kern = functools.partial(_pe_add_dropout_kernel,
                                 rate=float(dropout_rate), f_total=F, t_f=tF)
        grid_spec = pltpu.PrefetchScalarGridSpec(
            num_scalar_prefetch=1, grid=(n_blocks,),
            in_specs=[x_spec, pe_spec], out_specs=out_spec)
        seed_arr = jnp.asarray([seed], dtype=jnp.int32)
        out2 = pl.pallas_call(
            kern, out_shape=out_shape, grid_spec=grid_spec,
            compiler_params=cparams, cost_estimate=cost,
        )(seed_arr, x2, pe2)

    return out2.reshape(B, T, D)


# ---------------------------------------------------------------------------
# Demo / self-test
# ---------------------------------------------------------------------------

if __name__ == "__main__":
    B, T, D = 2, 8, 32          # batch, sequence, d_model
    SEQ_LEN = 16                # PE buffer longer than the input (module slices [:T])

    key = jax.random.PRNGKey(0)
    x = jax.random.normal(key, (B, T, D), dtype=jnp.float32)
    pe = build_positional_encoding(SEQ_LEN, D)

    # Eval path (dropout is identity): deterministic, compare to reference.
    fwd_eval = jax.jit(functools.partial(positional_encoding_forward,
                                         deterministic=True))
    out = fwd_eval(x, pe)
    jax.block_until_ready(out)
    assert out.shape == (B, T, D)
    ref = np.asarray(x) + np.asarray(pe)[:T][None]
    np.testing.assert_allclose(np.asarray(out), ref, rtol=1e-6, atol=1e-6)

    # Training path: fused add + inverted dropout (distribution-equivalent RNG;
    # does not bit-match torch's RNG stream).
    rate = 0.1
    fwd_train = jax.jit(functools.partial(positional_encoding_forward,
                                          dropout_rate=rate,
                                          deterministic=False, seed=1234))
    out_d = np.asarray(jax.block_until_ready(fwd_train(x, pe)))
    assert out_d.shape == (B, T, D)
    kept = out_d != 0.0
    np.testing.assert_allclose(out_d[kept], (ref / (1.0 - rate))[kept],
                               rtol=1e-5, atol=1e-5)
    keep_frac = float(kept.mean())
    assert 0.5 < keep_frac <= 1.0, keep_frac

    print("KERNEL_OK")
</pallas_src>

<mosaic_0001>
module attributes {stable_mosaic.version = 11 : i64} {
  func.func @_pe_add_kernel(%arg0: i32, %arg1: memref<2x256xf32, #tpu.memory_space<vmem>>, %arg2: memref<1x256xf32, #tpu.memory_space<vmem>>, %arg3: memref<2x256xf32, #tpu.memory_space<vmem>>) attributes {dimension_semantics = [#tpu.dimension_semantics<parallel>], iteration_bounds = array<i64: 1>, scalar_prefetch = 0 : i64, scratch_operands = 0 : i64, tpu.core_type = #tpu.core_type<tc>, window_params = [{transform_indices = @transform_0, window_bounds = array<i64: 2, 256>}, {transform_indices = @transform_1, window_bounds = array<i64: 1, 256>}, {transform_indices = @transform_2, window_bounds = array<i64: 2, 256>}]} {
    %c0 = arith.constant 0 : index
    %c0_0 = arith.constant 0 : index
    %0 = vector.load %arg1[%c0, %c0_0] : memref<2x256xf32, #tpu.memory_space<vmem>>, vector<2x256xf32>
    %c0_1 = arith.constant 0 : index
    %c0_2 = arith.constant 0 : index
    %1 = vector.load %arg2[%c0_1, %c0_2] : memref<1x256xf32, #tpu.memory_space<vmem>>, vector<1x256xf32>
    %2 = vector.broadcast %1 : vector<1x256xf32> to vector<2x256xf32>
    %3 = arith.addf %0, %2 : vector<2x256xf32>
    %c0_3 = arith.constant 0 : index
    %c0_4 = arith.constant 0 : index
    %4 = vector.load %arg3[%c0_3, %c0_4] : memref<2x256xf32, #tpu.memory_space<vmem>>, vector<2x256xf32>
    tpu.vector_store %arg3[%c0_3, %c0_4], %3 {strides = array<i32>} : memref<2x256xf32, #tpu.memory_space<vmem>>, vector<2x256xf32>,
    return
  }
  func.func @transform_0(%arg0: i32) -> (i32, i32) {
    %c0_i32 = arith.constant 0 : i32
    %c0_i32_0 = arith.constant 0 : i32
    return %c0_i32, %arg0 : i32, i32
  }
  func.func @transform_1(%arg0: i32) -> (i32, i32) {
    %c0_i32 = arith.constant 0 : i32
    %c0_i32_0 = arith.constant 0 : i32
    return %c0_i32, %arg0 : i32, i32
  }
  func.func @transform_2(%arg0: i32) -> (i32, i32) {
    %c0_i32 = arith.constant 0 : i32
    %c0_i32_0 = arith.constant 0 : i32
    return %c0_i32, %arg0 : i32, i32
  }
}

</mosaic_0001>

<llo_original>
// kernel: positional_encoding_forward.1
$region0: #{positional_encoding_forward.1}
  #allocation0 [shape = 'u32[]', space=smem, size = 0x4, offset = 0x4, fixed_abs, tag = 'smem constant byte address 0x4 - core index']
  #allocation1 [shape = 'u32[72,128]{1,0:T(1,128)}', space=vmem, size = 0x9000, scoped, tag = 'internal scratch']
  %s0 = inlined_call_operand.vmem [shape: f32[2,256], index: 0, kind: input, shape index: {}]
  %s1 = inlined_call_operand.vmem [shape: f32[1,512], index: 1, kind: input, shape index: {}]
  %s2 = inlined_call_operand.vmem [shape: f32[2,256], index: 2, kind: output, shape index: {}]
  %s3 = sld [smem:[#allocation0]]
  $region18: #{positional_encoding_forward.1} parent=0
    _
  %s5 = ssub.s32 1, %s3
  %s6 = scalar_select 0, %s5, %s3
  // Predicated region
  $region2: #{positional_encoding_forward.1} parent=0 // pred_check
    _
  $region3: #{positional_encoding_forward.1} parent=0 // pred_check_branch
    %8 = sbr.rel (0) target = $region5
  $region4: #{positional_encoding_forward.1} parent=0 // pred_region
    _
  $region5: #{positional_encoding_forward.1} parent=0 // pred_fallthru
    _
  // Predicated region
  $region6: #{positional_encoding_forward.1} parent=0 // pred_check
    _
  $region7: #{positional_encoding_forward.1} parent=0 // pred_check_branch
    %10 = sbr.rel (0) target = $region9
  $region8: #{positional_encoding_forward.1} parent=0 // pred_region
    _
  $region9: #{positional_encoding_forward.1} parent=0 // pred_fallthru
    _
  %v11 = vld [vmem:[%s0] sm:$0xf]
  %v12 = vld [vmem:[%s1] sm:$0x3]
  %v14 = vperm.slane %v12, 0
  %v15 = vperm.slane %v12, 1
  %v16 = vrot.slane %v15, 6
  %vm17 = vcmask 1041408
  %v18 = vsel %vm17, %v14, %v16
  %v20 = vadd.f32 %v11, %v18
  %21 = vst [vmem:[%s2] sm:$0xf] %v20
  // Predicated region
  $region10: #{positional_encoding_forward.1} parent=0 // pred_check
    _
  $region11: #{positional_encoding_forward.1} parent=0 // pred_check_branch
    %23 = sbr.rel (0) target = $region13
  $region12: #{positional_encoding_forward.1} parent=0 // pred_region
    _
  $region13: #{positional_encoding_forward.1} parent=0 // pred_fallthru
    _
  // Predicated region
  $region14: #{positional_encoding_forward.1} parent=0 // pred_check
    _
  $region15: #{positional_encoding_forward.1} parent=0 // pred_check_branch
    %25 = sbr.rel (0) target = $region17
  $region16: #{positional_encoding_forward.1} parent=0 // pred_region
    _
  $region17: #{positional_encoding_forward.1} parent=0 // pred_fallthru
    _

</llo_original>
